<compile_context>
chip_gen: v7x
topology: tpu7x:2x2x1
jax: 0.10.0
libtpu: 0.0.40
codegen_flags: <defaults>
</compile_context>

<pallas_src>
import jax
import jax.numpy as jnp
from jax.experimental import pallas as pl
from jax.experimental.pallas import tpu as pltpu

_LANES = 128


def _round_up(n, m):
    return ((n + m - 1) // m) * m


def _mlp3_kernel(x_ref, w1_ref, b1_ref, w2_ref, b2_ref, w3_ref, b3_ref, o_ref):
    """Fused (x@W1+b1).relu() @W2+b2 .relu() @W3+b3 on one batch tile."""
    x = x_ref[...].astype(jnp.float32)

    h = jnp.dot(x, w1_ref[...].astype(jnp.float32),
                preferred_element_type=jnp.float32)
    h = jnp.maximum(h + b1_ref[...].astype(jnp.float32), 0.0)

    h = jnp.dot(h, w2_ref[...].astype(jnp.float32),
                preferred_element_type=jnp.float32)
    h = jnp.maximum(h + b2_ref[...].astype(jnp.float32), 0.0)

    out = jnp.dot(h, w3_ref[...].astype(jnp.float32),
                  preferred_element_type=jnp.float32)
    out = out + b3_ref[...].astype(jnp.float32)

    o_ref[...] = out.astype(o_ref.dtype)


def discriminator_forward(x, params, *, batch_tile=256):
    """Pallas forward for Discriminator: MLP(D, [H1, H2], out_dim).squeeze(-1).

    params = ((w1, b1), (w2, b2), (w3, b3)); wi has shape (fan_in, fan_out).
    Accepts x of shape (..., D); returns shape (...,) when out_dim == 1.
    """
    (w1, b1), (w2, b2), (w3, b3) = params
    lead = x.shape[:-1]
    D = x.shape[-1]
    H1 = w1.shape[1]
    H2 = w2.shape[1]
    out_dim = w3.shape[1]

    x2 = x.reshape(-1, D)
    B = x2.shape[0]

    # Pad the tiny final layer out to a full 128-lane slab -> unmasked,
    # lane-dense output stores. Padding 256x1 -> 256x128 is negligible.
    n_out = _round_up(max(out_dim, 1), _LANES)
    w3p = jnp.zeros((H2, n_out), w3.dtype).at[:, :out_dim].set(w3)
    b3p = jnp.zeros((1, n_out), b3.dtype).at[0, :out_dim].set(b3)

    # Biases as (1, H) rows for in-kernel broadcast.
    b1r = b1.reshape(1, H1)
    b2r = b2.reshape(1, H2)

    # Batch tiling: sublane-aligned; only pad when the batch is ragged.
    tm = min(batch_tile, _round_up(B, 8))
    Bp = _round_up(B, tm)
    xb = x2 if Bp == B else jnp.pad(x2, ((0, Bp - B), (0, 0)))
    grid = (Bp // tm,)

    out = pl.pallas_call(
        _mlp3_kernel,
        out_shape=jax.ShapeDtypeStruct((Bp, n_out), x.dtype),
        grid_spec=pltpu.PrefetchScalarGridSpec(
            num_scalar_prefetch=0,
            grid=grid,
            in_specs=[
                pl.BlockSpec((tm, D), lambda i: (i, 0)),      # x tile
                pl.BlockSpec((D, H1), lambda i: (0, 0)),      # W1 (resident)
                pl.BlockSpec((1, H1), lambda i: (0, 0)),      # b1
                pl.BlockSpec((H1, H2), lambda i: (0, 0)),     # W2 (resident)
                pl.BlockSpec((1, H2), lambda i: (0, 0)),      # b2
                pl.BlockSpec((H2, n_out), lambda i: (0, 0)),  # W3 (lane-padded)
                pl.BlockSpec((1, n_out), lambda i: (0, 0)),   # b3 (lane-padded)
            ],
            out_specs=pl.BlockSpec((tm, n_out), lambda i: (i, 0)),
        ),
        compiler_params=pltpu.CompilerParams(
            dimension_semantics=("parallel",),  # batch tiles shard across TCs
        ),
    )(xb, w1, b1r, w2, b2r, w3p, b3p)

    out = out[:B, :out_dim].reshape(*lead, out_dim)
    if out_dim == 1:
        out = out[..., 0]  # torch .squeeze(-1)
    return out


def _discriminator_ref(x, params):
    """Pure-JAX reference mirroring the PyTorch forward exactly."""
    (w1, b1), (w2, b2), (w3, b3) = params
    h = jnp.maximum(x @ w1 + b1, 0.0)
    h = jnp.maximum(h @ w2 + b2, 0.0)
    out = h @ w3 + b3
    return out[..., 0] if w3.shape[1] == 1 else out


def _init_params(key, dims, dtype=jnp.float32):
    """PyTorch nn.Linear-style uniform(-1/sqrt(fan_in), 1/sqrt(fan_in)) init."""
    params = []
    for fan_in, fan_out in zip(dims[:-1], dims[1:]):
        key, kw, kb = jax.random.split(key, 3)
        bound = float(fan_in) ** -0.5
        w = jax.random.uniform(kw, (fan_in, fan_out), dtype, -bound, bound)
        b = jax.random.uniform(kb, (fan_out,), dtype, -bound, bound)
        params.append((w, b))
    return key, tuple(params)


if __name__ == "__main__":
    key = jax.random.PRNGKey(0)

    # Small shapes consistent with the module: batch=8 samples of input_dim=32,
    # default hidden_dims=[512, 256], output_dim=1.
    B, D = 8, 32
    hidden_dims = [512, 256]
    output_dim = 1

    key, params = _init_params(key, [D] + hidden_dims + [output_dim])
    key, kx = jax.random.split(key)
    x = jax.random.normal(kx, (B, D), dtype=jnp.float32)

    out = discriminator_forward(x, params)
    jax.block_until_ready(out)

    ref = _discriminator_ref(x, params)
    assert out.shape == (B,), out.shape
    assert out.dtype == x.dtype
    # Loose tolerance: MXU default matmul precision (bf16 passes) may differ
    # slightly from XLA's reference dot; real bugs would be orders larger.
    assert jnp.allclose(out, ref, atol=2e-2, rtol=2e-2), (out, ref)

    print("KERNEL_OK")
</pallas_src>

<mosaic_0001>
module attributes {stable_mosaic.version = 11 : i64} {
  func.func @_mlp3_kernel(%arg0: i32, %arg1: memref<8x32xf32, #tpu.memory_space<vmem>>, %arg2: memref<32x512xf32, #tpu.memory_space<vmem>>, %arg3: memref<1x512xf32, #tpu.memory_space<vmem>>, %arg4: memref<512x256xf32, #tpu.memory_space<vmem>>, %arg5: memref<1x256xf32, #tpu.memory_space<vmem>>, %arg6: memref<256x128xf32, #tpu.memory_space<vmem>>, %arg7: memref<1x128xf32, #tpu.memory_space<vmem>>, %arg8: memref<8x128xf32, #tpu.memory_space<vmem>>) attributes {dimension_semantics = [#tpu.dimension_semantics<parallel>], iteration_bounds = array<i64: 1>, scalar_prefetch = 0 : i64, scratch_operands = 0 : i64, tpu.core_type = #tpu.core_type<tc>, window_params = [{transform_indices = @transform_0, window_bounds = array<i64: 8, 32>}, {pipeline_mode = #tpu.pipeline_mode<synchronous>, transform_indices = @transform_1, window_bounds = array<i64: 32, 512>}, {pipeline_mode = #tpu.pipeline_mode<synchronous>, transform_indices = @transform_2, window_bounds = array<i64: 1, 512>}, {pipeline_mode = #tpu.pipeline_mode<synchronous>, transform_indices = @transform_3, window_bounds = array<i64: 512, 256>}, {pipeline_mode = #tpu.pipeline_mode<synchronous>, transform_indices = @transform_4, window_bounds = array<i64: 1, 256>}, {pipeline_mode = #tpu.pipeline_mode<synchronous>, transform_indices = @transform_5, window_bounds = array<i64: 256, 128>}, {pipeline_mode = #tpu.pipeline_mode<synchronous>, transform_indices = @transform_6, window_bounds = array<i64: 1, 128>}, {transform_indices = @transform_7, window_bounds = array<i64: 8, 128>}]} {
    %c0 = arith.constant 0 : index
    %c0_0 = arith.constant 0 : index
    %0 = vector.load %arg1[%c0, %c0_0] : memref<8x32xf32, #tpu.memory_space<vmem>>, vector<8x32xf32>
    %c0_1 = arith.constant 0 : index
    %c0_2 = arith.constant 0 : index
    %1 = vector.load %arg2[%c0_1, %c0_2] : memref<32x512xf32, #tpu.memory_space<vmem>>, vector<32x512xf32>
    %cst = arith.constant dense<0.000000e+00> : vector<8x512xf32>
    %2 = tpu.matmul %0, %1, %cst {dimension_numbers = #tpu.dot_dimension_numbers<[1], [0], [0], [1], [0, 0, 1, 1], [], []>} : vector<8x32xf32>, vector<32x512xf32>, vector<8x512xf32> -> vector<8x512xf32>
    %c0_3 = arith.constant 0 : index
    %c0_4 = arith.constant 0 : index
    %3 = vector.load %arg3[%c0_3, %c0_4] : memref<1x512xf32, #tpu.memory_space<vmem>>, vector<1x512xf32>
    %4 = vector.broadcast %3 : vector<1x512xf32> to vector<8x512xf32>
    %5 = arith.addf %2, %4 : vector<8x512xf32>
    %cst_5 = arith.constant 0.000000e+00 : f32
    %6 = vector.broadcast %cst_5 : f32 to vector<8x512xf32>
    %7 = arith.maximumf %5, %6 : vector<8x512xf32>
    %c0_6 = arith.constant 0 : index
    %c0_7 = arith.constant 0 : index
    %8 = vector.load %arg4[%c0_6, %c0_7] : memref<512x256xf32, #tpu.memory_space<vmem>>, vector<512x256xf32>
    %cst_8 = arith.constant dense<0.000000e+00> : vector<8x256xf32>
    %9 = tpu.matmul %7, %8, %cst_8 {dimension_numbers = #tpu.dot_dimension_numbers<[1], [0], [0], [1], [0, 0, 1, 1], [], []>} : vector<8x512xf32>, vector<512x256xf32>, vector<8x256xf32> -> vector<8x256xf32>
    %c0_9 = arith.constant 0 : index
    %c0_10 = arith.constant 0 : index
    %10 = vector.load %arg5[%c0_9, %c0_10] : memref<1x256xf32, #tpu.memory_space<vmem>>, vector<1x256xf32>
    %11 = vector.broadcast %10 : vector<1x256xf32> to vector<8x256xf32>
    %12 = arith.addf %9, %11 : vector<8x256xf32>
    %cst_11 = arith.constant 0.000000e+00 : f32
    %13 = vector.broadcast %cst_11 : f32 to vector<8x256xf32>
    %14 = arith.maximumf %12, %13 : vector<8x256xf32>
    %c0_12 = arith.constant 0 : index
    %c0_13 = arith.constant 0 : index
    %15 = vector.load %arg6[%c0_12, %c0_13] : memref<256x128xf32, #tpu.memory_space<vmem>>, vector<256x128xf32>
    %cst_14 = arith.constant dense<0.000000e+00> : vector<8x128xf32>
    %16 = tpu.matmul %14, %15, %cst_14 {dimension_numbers = #tpu.dot_dimension_numbers<[1], [0], [0], [1], [0, 0, 1, 1], [], []>} : vector<8x256xf32>, vector<256x128xf32>, vector<8x128xf32> -> vector<8x128xf32>
    %c0_15 = arith.constant 0 : index
    %c0_16 = arith.constant 0 : index
    %17 = vector.load %arg7[%c0_15, %c0_16] : memref<1x128xf32, #tpu.memory_space<vmem>>, vector<1x128xf32>
    %18 = vector.broadcast %17 : vector<1x128xf32> to vector<8x128xf32>
    %19 = arith.addf %16, %18 : vector<8x128xf32>
    %c0_17 = arith.constant 0 : index
    %c0_18 = arith.constant 0 : index
    %20 = vector.load %arg8[%c0_17, %c0_18] : memref<8x128xf32, #tpu.memory_space<vmem>>, vector<8x128xf32>
    tpu.vector_store %arg8[%c0_17, %c0_18], %19 {strides = array<i32>} : memref<8x128xf32, #tpu.memory_space<vmem>>, vector<8x128xf32>,
    return
  }
  func.func @transform_0(%arg0: i32) -> (i32, i32) {
    %c0_i32 = arith.constant 0 : i32
    %c0_i32_0 = arith.constant 0 : i32
    return %arg0, %c0_i32 : i32, i32
  }
  func.func @transform_1(%arg0: i32) -> (i32, i32) {
    %c0_i32 = arith.constant 0 : i32
    %c0_i32_0 = arith.constant 0 : i32
    %c0_i32_1 = arith.constant 0 : i32
    return %c0_i32, %c0_i32_0 : i32, i32
  }
  func.func @transform_2(%arg0: i32) -> (i32, i32) {
    %c0_i32 = arith.constant 0 : i32
    %c0_i32_0 = arith.constant 0 : i32
    %c0_i32_1 = arith.constant 0 : i32
    return %c0_i32, %c0_i32_0 : i32, i32
  }
  func.func @transform_3(%arg0: i32) -> (i32, i32) {
    %c0_i32 = arith.constant 0 : i32
    %c0_i32_0 = arith.constant 0 : i32
    %c0_i32_1 = arith.constant 0 : i32
    return %c0_i32, %c0_i32_0 : i32, i32
  }
  func.func @transform_4(%arg0: i32) -> (i32, i32) {
    %c0_i32 = arith.constant 0 : i32
    %c0_i32_0 = arith.constant 0 : i32
    %c0_i32_1 = arith.constant 0 : i32
    return %c0_i32, %c0_i32_0 : i32, i32
  }
  func.func @transform_5(%arg0: i32) -> (i32, i32) {
    %c0_i32 = arith.constant 0 : i32
    %c0_i32_0 = arith.constant 0 : i32
    %c0_i32_1 = arith.constant 0 : i32
    return %c0_i32, %c0_i32_0 : i32, i32
  }
  func.func @transform_6(%arg0: i32) -> (i32, i32) {
    %c0_i32 = arith.constant 0 : i32
    %c0_i32_0 = arith.constant 0 : i32
    %c0_i32_1 = arith.constant 0 : i32
    return %c0_i32, %c0_i32_0 : i32, i32
  }
  func.func @transform_7(%arg0: i32) -> (i32, i32) {
    %c0_i32 = arith.constant 0 : i32
    %c0_i32_0 = arith.constant 0 : i32
    return %arg0, %c0_i32 : i32, i32
  }
}

</mosaic_0001>

<llo_original>
// kernel: tpu_custom_call.1
$region0: #{tpu_custom_call.1}
  #allocation0 [shape = 'u32[]', space=smem, size = 0x4, offset = 0x4, fixed_abs, tag = 'smem constant byte address 0x4 - core index']
  #allocation1 [shape = 'u32[144,128]{1,0:T(1,128)}', space=vmem, size = 0x12000, scoped, tag = 'internal scratch']
  %s0 = inlined_call_operand.hbm [shape: f32[8,32], index: 0, kind: input, shape index: {}]
  %s1 = inlined_call_operand.hbm [shape: f32[32,512], index: 1, kind: input, shape index: {}]
  %s2 = inlined_call_operand.vmem [shape: f32[1,512], index: 2, kind: input, shape index: {}]
  %s3 = inlined_call_operand.hbm [shape: f32[512,256], index: 3, kind: input, shape index: {}]
  %s4 = inlined_call_operand.vmem [shape: f32[1,256], index: 4, kind: input, shape index: {}]
  %s5 = inlined_call_operand.hbm [shape: f32[256,128], index: 5, kind: input, shape index: {}]
  %s6 = inlined_call_operand.vmem [shape: f32[1,128], index: 6, kind: input, shape index: {}]
  %s7 = inlined_call_operand.hbm [shape: f32[8,128], index: 7, kind: output, shape index: {}]
  %s8 = sld [smem:[#allocation0]]
  $region54: #{tpu_custom_call.1} parent=0
    _
  %s10 = ssub.s32 1, %s8
  %s11 = scalar_select 0, %s10, %s8
  $region1: #{tpu_custom_call.1} parent=0
    #allocation2 [shape = 'u8[4096]{0}', space=vmem, size = 0x1000, scoped, tag = 'input window, operand 0, single buffered']
    #allocation3 [shape = 's32[1]{0}', space=sflag, size = 0x4, scoped, tag = 'scoped memory for tpu_custom_call.1']
    #allocation4 [shape = 's32[1]{0}', space=sflag, size = 0x4, scoped, tag = 'scoped memory for tpu_custom_call.1']
    #allocation5 [shape = 'u8[65536]{0}', space=vmem, size = 0x10000, scoped, tag = 'input window, operand 1, single buffered']
    #allocation6 [shape = 's32[1]{0}', space=sflag, size = 0x4, scoped, tag = 'scoped memory for tpu_custom_call.1']
    #allocation7 [shape = 'u8[524288]{0}', space=vmem, size = 0x80000, scoped, tag = 'input window, operand 3, single buffered']
    #allocation8 [shape = 'u8[131072]{0}', space=vmem, size = 0x20000, scoped, tag = 'input window, operand 5, single buffered']
    #allocation9 [shape = 's32[1]{0}', space=sflag, size = 0x4, scoped, tag = 'scoped memory for tpu_custom_call.1']
    #allocation10 [shape = 'u8[4096]{0}', space=vmem, size = 0x1000, scoped, tag = 'output window, operand 0, single buffered']
    %12 = vsyncpa [#allocation3], 0
    %13 = vsyncpa [#allocation6], 0
    %14 = vsyncpa [#allocation9], 0
    %15 = vsyncpa [#allocation4], 0
    // Predicated region
    $region2: #{tpu_custom_call.1} parent=1 // pred_check
      _
    $region3: #{tpu_custom_call.1} parent=1 // pred_check_branch
      %17 = sbr.rel (0) target = $region5
    $region4: #{tpu_custom_call.1} parent=1 // pred_region
      %s19 = ssub.s32 128, 128
      %20 = vsyncadd [#allocation3], %s19
      %s22 = sshll.u32 [#allocation2], 4
      %s23 = int_to_ptr.vmem [resolvable:$true] %s22
      %25 = dma.hbm_to_vmem [thread:$0]  %s0, 128, %s23, [#allocation3]
    $region5: #{tpu_custom_call.1} parent=1 // pred_fallthru
      _
    // Predicated region
    $region6: #{tpu_custom_call.1} parent=1 // pred_check
      _
    $region7: #{tpu_custom_call.1} parent=1 // pred_check_branch
      %27 = sbr.rel (0) target = $region9
    $region8: #{tpu_custom_call.1} parent=1 // pred_region
      %s29 = ssub.s32 2048, 2048
      %30 = vsyncadd [#allocation6], %s29
      %s31 = sshll.u32 [#allocation5], 4
      %s32 = int_to_ptr.vmem [resolvable:$true] %s31
      %37 = dma.hbm_to_vmem [thread:$0]  %s1, 2048, %s32, [#allocation6], 512, 512, 32
    $region9: #{tpu_custom_call.1} parent=1 // pred_fallthru
      _
    // Predicated region
    $region10: #{tpu_custom_call.1} parent=1 // pred_check
      _
    $region11: #{tpu_custom_call.1} parent=1 // pred_check_branch
      %39 = sbr.rel (0) target = $region13
    $region12: #{tpu_custom_call.1} parent=1 // pred_region
      _
    $region13: #{tpu_custom_call.1} parent=1 // pred_fallthru
      _
    // Predicated region
    $region14: #{tpu_custom_call.1} parent=1 // pred_check
      _
    $region15: #{tpu_custom_call.1} parent=1 // pred_check_branch
      %41 = sbr.rel (0) target = $region17
    $region16: #{tpu_custom_call.1} parent=1 // pred_region
      %s43 = ssub.s32 16384, 16384
      %44 = vsyncadd [#allocation6], %s43
      %s45 = sshll.u32 [#allocation7], 4
      %s46 = int_to_ptr.vmem [resolvable:$true] %s45
      %51 = dma.hbm_to_vmem [thread:$0]  %s3, 16384, %s46, [#allocation6], 256, 256, 16
    $region17: #{tpu_custom_call.1} parent=1 // pred_fallthru
      _
    // Predicated region
    $region18: #{tpu_custom_call.1} parent=1 // pred_check
      _
    $region19: #{tpu_custom_call.1} parent=1 // pred_check_branch
      %53 = sbr.rel (0) target = $region21
    $region20: #{tpu_custom_call.1} parent=1 // pred_region
      _
    $region21: #{tpu_custom_call.1} parent=1 // pred_fallthru
      _
    // Predicated region
    $region22: #{tpu_custom_call.1} parent=1 // pred_check
      _
    $region23: #{tpu_custom_call.1} parent=1 // pred_check_branch
      %55 = sbr.rel (0) target = $region25
    $region24: #{tpu_custom_call.1} parent=1 // pred_region
      %s57 = ssub.s32 4096, 4096
      %58 = vsyncadd [#allocation9], %s57
      %s59 = sshll.u32 [#allocation8], 4
      %s60 = int_to_ptr.vmem [resolvable:$true] %s59
      %65 = dma.hbm_to_vmem [thread:$0]  %s5, 4096, %s60, [#allocation9], 128, 128, 8
    $region25: #{tpu_custom_call.1} parent=1 // pred_fallthru
      _
    // Predicated region
    $region26: #{tpu_custom_call.1} parent=1 // pred_check
      _
    $region27: #{tpu_custom_call.1} parent=1 // pred_check_branch
      %67 = sbr.rel (0) target = $region29
    $region28: #{tpu_custom_call.1} parent=1 // pred_region
      _
    $region29: #{tpu_custom_call.1} parent=1 // pred_fallthru
      _
    // Predicated region
    $region30: #{tpu_custom_call.1} parent=1 // pred_check
      _
    $region31: #{tpu_custom_call.1} parent=1 // pred_check_branch
      %69 = sbr.rel (0) target = $region33
    $region32: #{tpu_custom_call.1} parent=1 // pred_region
      %70 = dma.done [#allocation3], 128
    $region33: #{tpu_custom_call.1} parent=1 // pred_fallthru
      _
    // Predicated region
    $region34: #{tpu_custom_call.1} parent=1 // pred_check
      _
    $region35: #{tpu_custom_call.1} parent=1 // pred_check_branch
      %72 = sbr.rel (0) target = $region37
    $region36: #{tpu_custom_call.1} parent=1 // pred_region
      %73 = dma.done [#allocation6], 2048
    $region37: #{tpu_custom_call.1} parent=1 // pred_fallthru
      _
    // Predicated region
    $region38: #{tpu_custom_call.1} parent=1 // pred_check
      _
    $region39: #{tpu_custom_call.1} parent=1 // pred_check_branch
      %75 = sbr.rel (0) target = $region41
    $region40: #{tpu_custom_call.1} parent=1 // pred_region
      %76 = dma.done [#allocation6], 16384
    $region41: #{tpu_custom_call.1} parent=1 // pred_fallthru
      _
    // Predicated region
    $region42: #{tpu_custom_call.1} parent=1 // pred_check
      _
    $region43: #{tpu_custom_call.1} parent=1 // pred_check_branch
      %78 = sbr.rel (0) target = $region45
    $region44: #{tpu_custom_call.1} parent=1 // pred_region
      %79 = dma.done [#allocation9], 4096
    $region45: #{tpu_custom_call.1} parent=1 // pred_fallthru
      _
    %v80 = vld [vmem:[#allocation2] sm:$0xff]
    %v81 = vld [vmem:[#allocation5] sm:$0xff]
    %v82 = vld [vmem:[#allocation5 + $0x8] sm:$0xff]
    %v83 = vld [vmem:[#allocation5 + $0x10] sm:$0xff]
    %v84 = vld [vmem:[#allocation5 + $0x18] sm:$0xff]
    %v85 = vld [vmem:[#allocation5 + $0x20] sm:$0xff]
    %v86 = vld [vmem:[#allocation5 + $0x28] sm:$0xff]
    %v87 = vld [vmem:[#allocation5 + $0x30] sm:$0xff]
    %v88 = vld [vmem:[#allocation5 + $0x38] sm:$0xff]
    %v89 = vld [vmem:[#allocation5 + $0x40] sm:$0xff]
    %v90 = vld [vmem:[#allocation5 + $0x48] sm:$0xff]
    %v91 = vld [vmem:[#allocation5 + $0x50] sm:$0xff]
    %v92 = vld [vmem:[#allocation5 + $0x58] sm:$0xff]
    %v93 = vld [vmem:[#allocation5 + $0x60] sm:$0xff]
    %v94 = vld [vmem:[#allocation5 + $0x68] sm:$0xff]
    %v95 = vld [vmem:[#allocation5 + $0x70] sm:$0xff]
    %v96 = vld [vmem:[#allocation5 + $0x78] sm:$0xff]
    %v97 = vld [vmem:[%s2] sm:$0xf]
    %v99 = vlaneseq
    %v100 = vshrl.u32 %v99, 7
    %v101 = vsub.s32 0, %v100
    %v102 = vrot.slane %v97, %v101
    %v103 = vlaneseq
    %v104 = vshrl.u32 %v103, 7
    %v105 = vsub.s32 1, %v104
    %v106 = vrot.slane %v97, %v105
    %v107 = vlaneseq
    %v108 = vshrl.u32 %v107, 7
    %v109 = vsub.s32 2, %v108
    %v110 = vrot.slane %v97, %v109
    %v111 = vlaneseq
    %v112 = vshrl.u32 %v111, 7
    %v113 = vsub.s32 3, %v112
    %v114 = vrot.slane %v97, %v113
    %vm119 = vcmask 261120
    %v121 = vsel %vm119, %v80, 0
    %123 = vmatprep.subr.mxu0 %v82
    %124 = vmatpush1.msra.mxu0 %v81
    %125 = vmatprep.subr.mxu0 %v86
    %126 = vmatpush1.msra.mxu0 %v85
    %127 = vmatprep.subr.mxu0 %v90
    %128 = vmatpush1.msra.mxu0 %v89
    %129 = vmatprep.subr.mxu0 %v94
    %130 = vmatpush1.msra.mxu0 %v93
    %131 = vmatprep.subr.mxu0 0.0
    %132 = vmatpush1.msra.mxu0 0.0
    %133 = vmatprep.subr.mxu0 0.0
    %134 = vmatpush1.msra.mxu0 0.0
    %135 = vmatprep.subr.mxu0 0.0
    %136 = vmatpush1.msra.mxu0 0.0
    %137 = vmatprep.subr.mxu0 0.0
    %138 = vmatpush1.msra.mxu0 0.0
    %139 = vmatprep.subr.mxu0 0.0
    %140 = vmatpush1.msra.mxu0 0.0
    %141 = vmatprep.subr.mxu0 0.0
    %142 = vmatpush1.msra.mxu0 0.0
    %143 = vmatprep.subr.mxu0 0.0
    %144 = vmatpush1.msra.mxu0 0.0
    %145 = vmatprep.subr.mxu0 0.0
    %146 = vmatpush1.msra.mxu0 0.0
    %147 = vmatprep.subr.mxu0 0.0
    %148 = vmatpush1.msra.mxu0 0.0
    %149 = vmatprep.subr.mxu0 0.0
    %150 = vmatpush1.msra.mxu0 0.0
    %151 = vmatprep.subr.mxu0 0.0
    %152 = vmatpush1.msra.mxu0 0.0
    %153 = vmatprep.subr.mxu0 0.0
    %154 = vmatpush1.msra.mxu0 0.0
    %155 = vmatprep.subr.mxu0 0.0
    %156 = vmatpush1.msra.mxu0 0.0
    %157 = vmatprep.subr.mxu0 0.0
    %158 = vmatpush1.msra.mxu0 0.0
    %159 = vmatprep.subr.mxu0 0.0
    %160 = vmatpush1.msra.mxu0 0.0
    %161 = vmatprep.subr.mxu0 0.0
    %162 = vmatpush1.msra.mxu0 0.0
    %163 = vmatprep.subr.mxu0 0.0
    %164 = vmatpush1.msra.mxu0 0.0
    %165 = vmatprep.subr.mxu0 0.0
    %166 = vmatpush1.msra.mxu0 0.0
    %167 = vmatprep.subr.mxu0 0.0
    %168 = vmatpush1.msra.mxu0 0.0
    %169 = vmatprep.subr.mxu0 0.0
    %170 = vmatpush1.msra.mxu0 0.0
    %171 = vmatprep.subr.mxu0 0.0
    %172 = vmatpush1.msra.mxu0 0.0
    %173 = vmatprep.subr.mxu0 0.0
    %174 = vmatpush1.msra.mxu0 0.0
    %175 = vmatprep.subr.mxu0 0.0
    %176 = vmatpush1.msra.mxu0 0.0
    %177 = vmatprep.subr.mxu0 0.0
    %178 = vmatpush1.msra.mxu0 0.0
    %179 = vmatprep.subr.mxu0 0.0
    %180 = vmatpush1.msra.mxu0 0.0
    %181 = vmatprep.subr.mxu0 0.0
    %182 = vmatpush1.msra.mxu0 0.0
    %183 = vmatprep.subr.mxu0 0.0
    %184 = vmatpush1.msra.mxu0 0.0
    %185 = vmatprep.subr.mxu0 0.0
    %186 = vmatpush1.msra.mxu0 0.0
    %187 = vmatprep.mubr.f32.mxu0 0.0
    %188 = vmatmul.mubr.f32.gmra.mrb[0].mxu0 %v121
    %v189 = vpop.f32.mrb[0].mxu0
    %v190 = vadd.f32 %v102, %v189
    %v191 = vpop.f32.mrb[0].mxu0
    %v192 = vadd.f32 %v106, %v191
    %193 = vdwg.mxu0
    %194 = vmatprep.subr.mxu0 %v84
    %195 = vmatpush1.msra.mxu0 %v83
    %196 = vmatprep.subr.mxu0 %v88
    %197 = vmatpush1.msra.mxu0 %v87
    %198 = vmatprep.subr.mxu0 %v92
    %199 = vmatpush1.msra.mxu0 %v91
    %200 = vmatprep.subr.mxu0 %v96
    %201 = vmatpush1.msra.mxu0 %v95
    %202 = vmatprep.subr.mxu0 0.0
    %203 = vmatpush1.msra.mxu0 0.0
    %204 = vmatprep.subr.mxu0 0.0
    %205 = vmatpush1.msra.mxu0 0.0
    %206 = vmatprep.subr.mxu0 0.0
    %207 = vmatpush1.msra.mxu0 0.0
    %208 = vmatprep.subr.mxu0 0.0
    %209 = vmatpush1.msra.mxu0 0.0
    %210 = vmatprep.subr.mxu0 0.0
    %211 = vmatpush1.msra.mxu0 0.0
    %212 = vmatprep.subr.mxu0 0.0
    %213 = vmatpush1.msra.mxu0 0.0
    %214 = vmatprep.subr.mxu0 0.0
    %215 = vmatpush1.msra.mxu0 0.0
    %216 = vmatprep.subr.mxu0 0.0
    %217 = vmatpush1.msra.mxu0 0.0
    %218 = vmatprep.subr.mxu0 0.0
    %219 = vmatpush1.msra.mxu0 0.0
    %220 = vmatprep.subr.mxu0 0.0
    %221 = vmatpush1.msra.mxu0 0.0
    %222 = vmatprep.subr.mxu0 0.0
    %223 = vmatpush1.msra.mxu0 0.0
    %224 = vmatprep.subr.mxu0 0.0
    %225 = vmatpush1.msra.mxu0 0.0
    %226 = vmatprep.subr.mxu0 0.0
    %227 = vmatpush1.msra.mxu0 0.0
    %228 = vmatprep.subr.mxu0 0.0
    %229 = vmatpush1.msra.mxu0 0.0
    %230 = vmatprep.subr.mxu0 0.0
    %231 = vmatpush1.msra.mxu0 0.0
    %232 = vmatprep.subr.mxu0 0.0
    %233 = vmatpush1.msra.mxu0 0.0
    %234 = vmatprep.subr.mxu0 0.0
    %235 = vmatpush1.msra.mxu0 0.0
    %236 = vmatprep.subr.mxu0 0.0
    %237 = vmatpush1.msra.mxu0 0.0
    %238 = vmatprep.subr.mxu0 0.0
    %239 = vmatpush1.msra.mxu0 0.0
    %240 = vmatprep.subr.mxu0 0.0
    %241 = vmatpush1.msra.mxu0 0.0
    %242 = vmatprep.subr.mxu0 0.0
    %243 = vmatpush1.msra.mxu0 0.0
    %244 = vmatprep.subr.mxu0 0.0
    %245 = vmatpush1.msra.mxu0 0.0
    %246 = vmatprep.subr.mxu0 0.0
    %247 = vmatpush1.msra.mxu0 0.0
    %248 = vmatprep.subr.mxu0 0.0
    %249 = vmatpush1.msra.mxu0 0.0
    %250 = vmatprep.subr.mxu0 0.0
    %251 = vmatpush1.msra.mxu0 0.0
    %252 = vmatprep.subr.mxu0 0.0
    %253 = vmatpush1.msra.mxu0 0.0
    %254 = vmatprep.subr.mxu0 0.0
    %255 = vmatpush1.msra.mxu0 0.0
    %256 = vmatprep.subr.mxu0 0.0
    %257 = vmatpush1.msra.mxu0 0.0
    %258 = vmatprep.mubr.f32.mxu0 0.0
    %259 = vmatmul.mubr.f32.gmra.mrb[0].mxu0 %v121
    %v260 = vpop.f32.mrb[0].mxu0
    %v261 = vadd.f32 %v110, %v260
    %v262 = vpop.f32.mrb[0].mxu0
    %v263 = vadd.f32 %v114, %v262
    %264 = vdwg.mxu0
    %v265 = vmax.f32 %v190, 0.0
    %v266 = vmax.f32 %v192, 0.0
    %v267 = vmax.f32 %v261, 0.0
    %v268 = vmax.f32 %v263, 0.0
    %v269 = vld [vmem:[#allocation7] sm:$0xff]
    %v270 = vld [vmem:[#allocation7 + $0x8] sm:$0xff]
    %v271 = vld [vmem:[#allocation7 + $0x10] sm:$0xff]
    %v272 = vld [vmem:[#allocation7 + $0x18] sm:$0xff]
    %v273 = vld [vmem:[#allocation7 + $0x20] sm:$0xff]
    %v274 = vld [vmem:[#allocation7 + $0x28] sm:$0xff]
    %v275 = vld [vmem:[#allocation7 + $0x30] sm:$0xff]
    %v276 = vld [vmem:[#allocation7 + $0x38] sm:$0xff]
    %v277 = vld [vmem:[#allocation7 + $0x40] sm:$0xff]
    %v278 = vld [vmem:[#allocation7 + $0x48] sm:$0xff]
    %v279 = vld [vmem:[#allocation7 + $0x50] sm:$0xff]
    %v280 = vld [vmem:[#allocation7 + $0x58] sm:$0xff]
    %v281 = vld [vmem:[#allocation7 + $0x60] sm:$0xff]
    %v282 = vld [vmem:[#allocation7 + $0x68] sm:$0xff]
    %v283 = vld [vmem:[#allocation7 + $0x70] sm:$0xff]
    %v284 = vld [vmem:[#allocation7 + $0x78] sm:$0xff]
    %v285 = vld [vmem:[#allocation7 + $0x80] sm:$0xff]
    %v286 = vld [vmem:[#allocation7 + $0x88] sm:$0xff]
    %v287 = vld [vmem:[#allocation7 + $0x90] sm:$0xff]
    %v288 = vld [vmem:[#allocation7 + $0x98] sm:$0xff]
    %v289 = vld [vmem:[#allocation7 + $0xa0] sm:$0xff]
    %v290 = vld [vmem:[#allocation7 + $0xa8] sm:$0xff]
    %v291 = vld [vmem:[#allocation7 + $0xb0] sm:$0xff]
    %v292 = vld [vmem:[#allocation7 + $0xb8] sm:$0xff]
    %v293 = vld [vmem:[#allocation7 + $0xc0] sm:$0xff]
    %v294 = vld [vmem:[#allocation7 + $0xc8] sm:$0xff]
    %v295 = vld [vmem:[#allocation7 + $0xd0] sm:$0xff]
    %v296 = vld [vmem:[#allocation7 + $0xd8] sm:$0xff]
    %v297 = vld [vmem:[#allocation7 + $0xe0] sm:$0xff]
    %v298 = vld [vmem:[#allocation7 + $0xe8] sm:$0xff]
    %v299 = vld [vmem:[#allocation7 + $0xf0] sm:$0xff]
    %v300 = vld [vmem:[#allocation7 + $0xf8] sm:$0xff]
    %v301 = vld [vmem:[#allocation7 + $0x100] sm:$0xff]
    %v302 = vld [vmem:[#allocation7 + $0x108] sm:$0xff]
    %v303 = vld [vmem:[#allocation7 + $0x110] sm:$0xff]
    %v304 = vld [vmem:[#allocation7 + $0x118] sm:$0xff]
    %v305 = vld [vmem:[#allocation7 + $0x120] sm:$0xff]
    %v306 = vld [vmem:[#allocation7 + $0x128] sm:$0xff]
    %v307 = vld [vmem:[#allocation7 + $0x130] sm:$0xff]
    %v308 = vld [vmem:[#allocation7 + $0x138] sm:$0xff]
    %v309 = vld [vmem:[#allocation7 + $0x140] sm:$0xff]
    %v310 = vld [vmem:[#allocation7 + $0x148] sm:$0xff]
    %v311 = vld [vmem:[#allocation7 + $0x150] sm:$0xff]
    %v312 = vld [vmem:[#allocation7 + $0x158] sm:$0xff]
    %v313 = vld [vmem:[#allocation7 + $0x160] sm:$0xff]
    %v314 = vld [vmem:[#allocation7 + $0x168] sm:$0xff]
    %v315 = vld [vmem:[#allocation7 + $0x170] sm:$0xff]
    %v316 = vld [vmem:[#allocation7 + $0x178] sm:$0xff]
    %v317 = vld [vmem:[#allocation7 + $0x180] sm:$0xff]
    %v318 = vld [vmem:[#allocation7 + $0x188] sm:$0xff]
    %v319 = vld [vmem:[#allocation7 + $0x190] sm:$0xff]
    %v320 = vld [vmem:[#allocation7 + $0x198] sm:$0xff]
    %v321 = vld [vmem:[#allocation7 + $0x1a0] sm:$0xff]
    %v322 = vld [vmem:[#allocation7 + $0x1a8] sm:$0xff]
    %v323 = vld [vmem:[#allocation7 + $0x1b0] sm:$0xff]
    %v324 = vld [vmem:[#allocation7 + $0x1b8] sm:$0xff]
    %v325 = vld [vmem:[#allocation7 + $0x1c0] sm:$0xff]
    %v326 = vld [vmem:[#allocation7 + $0x1c8] sm:$0xff]
    %v327 = vld [vmem:[#allocation7 + $0x1d0] sm:$0xff]
    %v328 = vld [vmem:[#allocation7 + $0x1d8] sm:$0xff]
    %v329 = vld [vmem:[#allocation7 + $0x1e0] sm:$0xff]
    %v330 = vld [vmem:[#allocation7 + $0x1e8] sm:$0xff]
    %v331 = vld [vmem:[#allocation7 + $0x1f0] sm:$0xff]
    %v332 = vld [vmem:[#allocation7 + $0x1f8] sm:$0xff]
    %v333 = vld [vmem:[#allocation7 + $0x200] sm:$0xff]
    %v334 = vld [vmem:[#allocation7 + $0x208] sm:$0xff]
    %v335 = vld [vmem:[#allocation7 + $0x210] sm:$0xff]
    %v336 = vld [vmem:[#allocation7 + $0x218] sm:$0xff]
    %v337 = vld [vmem:[#allocation7 + $0x220] sm:$0xff]
    %v338 = vld [vmem:[#allocation7 + $0x228] sm:$0xff]
    %v339 = vld [vmem:[#allocation7 + $0x230] sm:$0xff]
    %v340 = vld [vmem:[#allocation7 + $0x238] sm:$0xff]
    %v341 = vld [vmem:[#allocation7 + $0x240] sm:$0xff]
    %v342 = vld [vmem:[#allocation7 + $0x248] sm:$0xff]
    %v343 = vld [vmem:[#allocation7 + $0x250] sm:$0xff]
    %v344 = vld [vmem:[#allocation7 + $0x258] sm:$0xff]
    %v345 = vld [vmem:[#allocation7 + $0x260] sm:$0xff]
    %v346 = vld [vmem:[#allocation7 + $0x268] sm:$0xff]
    %v347 = vld [vmem:[#allocation7 + $0x270] sm:$0xff]
    %v348 = vld [vmem:[#allocation7 + $0x278] sm:$0xff]
    %v349 = vld [vmem:[#allocation7 + $0x280] sm:$0xff]
    %v350 = vld [vmem:[#allocation7 + $0x288] sm:$0xff]
    %v351 = vld [vmem:[#allocation7 + $0x290] sm:$0xff]
    %v352 = vld [vmem:[#allocation7 + $0x298] sm:$0xff]
    %v353 = vld [vmem:[#allocation7 + $0x2a0] sm:$0xff]
    %v354 = vld [vmem:[#allocation7 + $0x2a8] sm:$0xff]
    %v355 = vld [vmem:[#allocation7 + $0x2b0] sm:$0xff]
    %v356 = vld [vmem:[#allocation7 + $0x2b8] sm:$0xff]
    %v357 = vld [vmem:[#allocation7 + $0x2c0] sm:$0xff]
    %v358 = vld [vmem:[#allocation7 + $0x2c8] sm:$0xff]
    %v359 = vld [vmem:[#allocation7 + $0x2d0] sm:$0xff]
    %v360 = vld [vmem:[#allocation7 + $0x2d8] sm:$0xff]
    %v361 = vld [vmem:[#allocation7 + $0x2e0] sm:$0xff]
    %v362 = vld [vmem:[#allocation7 + $0x2e8] sm:$0xff]
    %v363 = vld [vmem:[#allocation7 + $0x2f0] sm:$0xff]
    %v364 = vld [vmem:[#allocation7 + $0x2f8] sm:$0xff]
    %v365 = vld [vmem:[#allocation7 + $0x300] sm:$0xff]
    %v366 = vld [vmem:[#allocation7 + $0x308] sm:$0xff]
    %v367 = vld [vmem:[#allocation7 + $0x310] sm:$0xff]
    %v368 = vld [vmem:[#allocation7 + $0x318] sm:$0xff]
    %v369 = vld [vmem:[#allocation7 + $0x320] sm:$0xff]
    %v370 = vld [vmem:[#allocation7 + $0x328] sm:$0xff]
    %v371 = vld [vmem:[#allocation7 + $0x330] sm:$0xff]
    %v372 = vld [vmem:[#allocation7 + $0x338] sm:$0xff]
    %v373 = vld [vmem:[#allocation7 + $0x340] sm:$0xff]
    %v374 = vld [vmem:[#allocation7 + $0x348] sm:$0xff]
    %v375 = vld [vmem:[#allocation7 + $0x350] sm:$0xff]
    %v376 = vld [vmem:[#allocation7 + $0x358] sm:$0xff]
    %v377 = vld [vmem:[#allocation7 + $0x360] sm:$0xff]
    %v378 = vld [vmem:[#allocation7 + $0x368] sm:$0xff]
    %v379 = vld [vmem:[#allocation7 + $0x370] sm:$0xff]
    %v380 = vld [vmem:[#allocation7 + $0x378] sm:$0xff]
    %v381 = vld [vmem:[#allocation7 + $0x380] sm:$0xff]
    %v382 = vld [vmem:[#allocation7 + $0x388] sm:$0xff]
    %v383 = vld [vmem:[#allocation7 + $0x390] sm:$0xff]
    %v384 = vld [vmem:[#allocation7 + $0x398] sm:$0xff]
    %v385 = vld [vmem:[#allocation7 + $0x3a0] sm:$0xff]
    %v386 = vld [vmem:[#allocation7 + $0x3a8] sm:$0xff]
    %v387 = vld [vmem:[#allocation7 + $0x3b0] sm:$0xff]
    %v388 = vld [vmem:[#allocation7 + $0x3b8] sm:$0xff]
    %v389 = vld [vmem:[#allocation7 + $0x3c0] sm:$0xff]
    %v390 = vld [vmem:[#allocation7 + $0x3c8] sm:$0xff]
    %v391 = vld [vmem:[#allocation7 + $0x3d0] sm:$0xff]
    %v392 = vld [vmem:[#allocation7 + $0x3d8] sm:$0xff]
    %v393 = vld [vmem:[#allocation7 + $0x3e0] sm:$0xff]
    %v394 = vld [vmem:[#allocation7 + $0x3e8] sm:$0xff]
    %v395 = vld [vmem:[#allocation7 + $0x3f0] sm:$0xff]
    %v396 = vld [vmem:[#allocation7 + $0x3f8] sm:$0xff]
    %v397 = vld [vmem:[%s4] sm:$0x3]
    %v399 = vlaneseq
    %v400 = vshrl.u32 %v399, 7
    %v401 = vsub.s32 0, %v400
    %v402 = vrot.slane %v397, %v401
    %v403 = vlaneseq
    %v404 = vshrl.u32 %v403, 7
    %v405 = vsub.s32 1, %v404
    %v406 = vrot.slane %v397, %v405
    %409 = vmatprep.subr.mxu0 %v270
    %410 = vmatpush1.msra.mxu0 %v269
    %411 = vmatprep.subr.mxu0 %v272
    %412 = vmatpush1.msra.mxu0 %v271
    %413 = vmatprep.subr.mxu0 %v274
    %414 = vmatpush1.msra.mxu0 %v273
    %415 = vmatprep.subr.mxu0 %v276
    %416 = vmatpush1.msra.mxu0 %v275
    %417 = vmatprep.subr.mxu0 %v278
    %418 = vmatpush1.msra.mxu0 %v277
    %419 = vmatprep.subr.mxu0 %v280
    %420 = vmatpush1.msra.mxu0 %v279
    %421 = vmatprep.subr.mxu0 %v282
    %422 = vmatpush1.msra.mxu0 %v281
    %423 = vmatprep.subr.mxu0 %v284
    %424 = vmatpush1.msra.mxu0 %v283
    %425 = vmatprep.subr.mxu0 %v286
    %426 = vmatpush1.msra.mxu0 %v285
    %427 = vmatprep.subr.mxu0 %v288
    %428 = vmatpush1.msra.mxu0 %v287
    %429 = vmatprep.subr.mxu0 %v290
    %430 = vmatpush1.msra.mxu0 %v289
    %431 = vmatprep.subr.mxu0 %v292
    %432 = vmatpush1.msra.mxu0 %v291
    %433 = vmatprep.subr.mxu0 %v294
    %434 = vmatpush1.msra.mxu0 %v293
    %435 = vmatprep.subr.mxu0 %v296
    %436 = vmatpush1.msra.mxu0 %v295
    %437 = vmatprep.subr.mxu0 %v298
    %438 = vmatpush1.msra.mxu0 %v297
    %439 = vmatprep.subr.mxu0 %v300
    %440 = vmatpush1.msra.mxu0 %v299
    %441 = vmatprep.subr.mxu0 %v302
    %442 = vmatpush1.msra.mxu0 %v301
    %443 = vmatprep.subr.mxu0 %v304
    %444 = vmatpush1.msra.mxu0 %v303
    %445 = vmatprep.subr.mxu0 %v306
    %446 = vmatpush1.msra.mxu0 %v305
    %447 = vmatprep.subr.mxu0 %v308
    %448 = vmatpush1.msra.mxu0 %v307
    %449 = vmatprep.subr.mxu0 %v310
    %450 = vmatpush1.msra.mxu0 %v309
    %451 = vmatprep.subr.mxu0 %v312
    %452 = vmatpush1.msra.mxu0 %v311
    %453 = vmatprep.subr.mxu0 %v314
    %454 = vmatpush1.msra.mxu0 %v313
    %455 = vmatprep.subr.mxu0 %v316
    %456 = vmatpush1.msra.mxu0 %v315
    %457 = vmatprep.subr.mxu0 %v318
    %458 = vmatpush1.msra.mxu0 %v317
    %459 = vmatprep.subr.mxu0 %v320
    %460 = vmatpush1.msra.mxu0 %v319
    %461 = vmatprep.subr.mxu0 %v322
    %462 = vmatpush1.msra.mxu0 %v321
    %463 = vmatprep.subr.mxu0 %v324
    %464 = vmatpush1.msra.mxu0 %v323
    %465 = vmatprep.subr.mxu0 %v326
    %466 = vmatpush1.msra.mxu0 %v325
    %467 = vmatprep.subr.mxu0 %v328
    %468 = vmatpush1.msra.mxu0 %v327
    %469 = vmatprep.subr.mxu0 %v330
    %470 = vmatpush1.msra.mxu0 %v329
    %471 = vmatprep.subr.mxu0 %v332
    %472 = vmatpush1.msra.mxu0 %v331
    %473 = vmatprep.mubr.f32.mxu0 %v266
    %474 = vmatmul.mubr.f32.gmra.mrb[0].mxu0 %v265
    %v475 = vpop.f32.mrb[0].mxu0
    %v476 = vadd.f32 %v402, %v475
    %v477 = vpop.f32.mrb[0].mxu0
    %v478 = vadd.f32 %v406, %v477
    %479 = vdwg.mxu0
    %480 = vmatprep.subr.mxu0 %v334
    %481 = vmatpush1.msra.mxu0 %v333
    %482 = vmatprep.subr.mxu0 %v336
    %483 = vmatpush1.msra.mxu0 %v335
    %484 = vmatprep.subr.mxu0 %v338
    %485 = vmatpush1.msra.mxu0 %v337
    %486 = vmatprep.subr.mxu0 %v340
    %487 = vmatpush1.msra.mxu0 %v339
    %488 = vmatprep.subr.mxu0 %v342
    %489 = vmatpush1.msra.mxu0 %v341
    %490 = vmatprep.subr.mxu0 %v344
    %491 = vmatpush1.msra.mxu0 %v343
    %492 = vmatprep.subr.mxu0 %v346
    %493 = vmatpush1.msra.mxu0 %v345
    %494 = vmatprep.subr.mxu0 %v348
    %495 = vmatpush1.msra.mxu0 %v347
    %496 = vmatprep.subr.mxu0 %v350
    %497 = vmatpush1.msra.mxu0 %v349
    %498 = vmatprep.subr.mxu0 %v352
    %499 = vmatpush1.msra.mxu0 %v351
    %500 = vmatprep.subr.mxu0 %v354
    %501 = vmatpush1.msra.mxu0 %v353
    %502 = vmatprep.subr.mxu0 %v356
    %503 = vmatpush1.msra.mxu0 %v355
    %504 = vmatprep.subr.mxu0 %v358
    %505 = vmatpush1.msra.mxu0 %v357
    %506 = vmatprep.subr.mxu0 %v360
    %507 = vmatpush1.msra.mxu0 %v359
    %508 = vmatprep.subr.mxu0 %v362
    %509 = vmatpush1.msra.mxu0 %v361
    %510 = vmatprep.subr.mxu0 %v364
    %511 = vmatpush1.msra.mxu0 %v363
    %512 = vmatprep.subr.mxu0 %v366
    %513 = vmatpush1.msra.mxu0 %v365
    %514 = vmatprep.subr.mxu0 %v368
    %515 = vmatpush1.msra.mxu0 %v367
    %516 = vmatprep.subr.mxu0 %v370
    %517 = vmatpush1.msra.mxu0 %v369
    %518 = vmatprep.subr.mxu0 %v372
    %519 = vmatpush1.msra.mxu0 %v371
    %520 = vmatprep.subr.mxu0 %v374
    %521 = vmatpush1.msra.mxu0 %v373
    %522 = vmatprep.subr.mxu0 %v376
    %523 = vmatpush1.msra.mxu0 %v375
    %524 = vmatprep.subr.mxu0 %v378
    %525 = vmatpush1.msra.mxu0 %v377
    %526 = vmatprep.subr.mxu0 %v380
    %527 = vmatpush1.msra.mxu0 %v379
    %528 = vmatprep.subr.mxu0 %v382
    %529 = vmatpush1.msra.mxu0 %v381
    %530 = vmatprep.subr.mxu0 %v384
    %531 = vmatpush1.msra.mxu0 %v383
    %532 = vmatprep.subr.mxu0 %v386
    %533 = vmatpush1.msra.mxu0 %v385
    %534 = vmatprep.subr.mxu0 %v388
    %535 = vmatpush1.msra.mxu0 %v387
    %536 = vmatprep.subr.mxu0 %v390
    %537 = vmatpush1.msra.mxu0 %v389
    %538 = vmatprep.subr.mxu0 %v392
    %539 = vmatpush1.msra.mxu0 %v391
    %540 = vmatprep.subr.mxu0 %v394
    %541 = vmatpush1.msra.mxu0 %v393
    %542 = vmatprep.subr.mxu0 %v396
    %543 = vmatpush1.msra.mxu0 %v395
    %544 = vmatprep.mubr.f32.mxu0 %v268
    %545 = vmatmul.mubr.f32.gmra.mrb[0].mxu0 %v267
    %v546 = vpop.f32.mrb[0].mxu0
    %v547 = vadd.f32 %v476, %v546
    %v548 = vpop.f32.mrb[0].mxu0
    %v549 = vadd.f32 %v478, %v548
    %550 = vdwg.mxu0
    %v551 = vmax.f32 %v547, 0.0
    %v552 = vmax.f32 %v549, 0.0
    %v553 = vld [vmem:[#allocation8] sm:$0xff]
    %v554 = vld [vmem:[#allocation8 + $0x8] sm:$0xff]
    %v555 = vld [vmem:[#allocation8 + $0x10] sm:$0xff]
    %v556 = vld [vmem:[#allocation8 + $0x18] sm:$0xff]
    %v557 = vld [vmem:[#allocation8 + $0x20] sm:$0xff]
    %v558 = vld [vmem:[#allocation8 + $0x28] sm:$0xff]
    %v559 = vld [vmem:[#allocation8 + $0x30] sm:$0xff]
    %v560 = vld [vmem:[#allocation8 + $0x38] sm:$0xff]
    %v561 = vld [vmem:[#allocation8 + $0x40] sm:$0xff]
    %v562 = vld [vmem:[#allocation8 + $0x48] sm:$0xff]
    %v563 = vld [vmem:[#allocation8 + $0x50] sm:$0xff]
    %v564 = vld [vmem:[#allocation8 + $0x58] sm:$0xff]
    %v565 = vld [vmem:[#allocation8 + $0x60] sm:$0xff]
    %v566 = vld [vmem:[#allocation8 + $0x68] sm:$0xff]
    %v567 = vld [vmem:[#allocation8 + $0x70] sm:$0xff]
    %v568 = vld [vmem:[#allocation8 + $0x78] sm:$0xff]
    %v569 = vld [vmem:[#allocation8 + $0x80] sm:$0xff]
    %v570 = vld [vmem:[#allocation8 + $0x88] sm:$0xff]
    %v571 = vld [vmem:[#allocation8 + $0x90] sm:$0xff]
    %v572 = vld [vmem:[#allocation8 + $0x98] sm:$0xff]
    %v573 = vld [vmem:[#allocation8 + $0xa0] sm:$0xff]
    %v574 = vld [vmem:[#allocation8 + $0xa8] sm:$0xff]
    %v575 = vld [vmem:[#allocation8 + $0xb0] sm:$0xff]
    %v576 = vld [vmem:[#allocation8 + $0xb8] sm:$0xff]
    %v577 = vld [vmem:[#allocation8 + $0xc0] sm:$0xff]
    %v578 = vld [vmem:[#allocation8 + $0xc8] sm:$0xff]
    %v579 = vld [vmem:[#allocation8 + $0xd0] sm:$0xff]
    %v580 = vld [vmem:[#allocation8 + $0xd8] sm:$0xff]
    %v581 = vld [vmem:[#allocation8 + $0xe0] sm:$0xff]
    %v582 = vld [vmem:[#allocation8 + $0xe8] sm:$0xff]
    %v583 = vld [vmem:[#allocation8 + $0xf0] sm:$0xff]
    %v584 = vld [vmem:[#allocation8 + $0xf8] sm:$0xff]
    %v585 = vld [vmem:[%s6] sm:$0x1]
    %v587 = vlaneseq
    %v588 = vshrl.u32 %v587, 7
    %v589 = vsub.s32 0, %v588
    %v590 = vrot.slane %v585, %v589
    %592 = vmatprep.subr.mxu0 0.0
    %593 = vmatpush1.msra.mxu0 %v553
    %594 = vmatprep.subr.mxu0 0.0
    %595 = vmatpush1.msra.mxu0 %v554
    %596 = vmatprep.subr.mxu0 0.0
    %597 = vmatpush1.msra.mxu0 %v555
    %598 = vmatprep.subr.mxu0 0.0
    %599 = vmatpush1.msra.mxu0 %v556
    %600 = vmatprep.subr.mxu0 0.0
    %601 = vmatpush1.msra.mxu0 %v557
    %602 = vmatprep.subr.mxu0 0.0
    %603 = vmatpush1.msra.mxu0 %v558
    %604 = vmatprep.subr.mxu0 0.0
    %605 = vmatpush1.msra.mxu0 %v559
    %606 = vmatprep.subr.mxu0 0.0
    %607 = vmatpush1.msra.mxu0 %v560
    %608 = vmatprep.subr.mxu0 0.0
    %609 = vmatpush1.msra.mxu0 %v561
    %610 = vmatprep.subr.mxu0 0.0
    %611 = vmatpush1.msra.mxu0 %v562
    %612 = vmatprep.subr.mxu0 0.0
    %613 = vmatpush1.msra.mxu0 %v563
    %614 = vmatprep.subr.mxu0 0.0
    %615 = vmatpush1.msra.mxu0 %v564
    %616 = vmatprep.subr.mxu0 0.0
    %617 = vmatpush1.msra.mxu0 %v565
    %618 = vmatprep.subr.mxu0 0.0
    %619 = vmatpush1.msra.mxu0 %v566
    %620 = vmatprep.subr.mxu0 0.0
    %621 = vmatpush1.msra.mxu0 %v567
    %622 = vmatprep.subr.mxu0 0.0
    %623 = vmatpush1.msra.mxu0 %v568
    %624 = vmatprep.subr.mxu0 0.0
    %625 = vmatpush1.msra.mxu0 %v569
    %626 = vmatprep.subr.mxu0 0.0
    %627 = vmatpush1.msra.mxu0 %v570
    %628 = vmatprep.subr.mxu0 0.0
    %629 = vmatpush1.msra.mxu0 %v571
    %630 = vmatprep.subr.mxu0 0.0
    %631 = vmatpush1.msra.mxu0 %v572
    %632 = vmatprep.subr.mxu0 0.0
    %633 = vmatpush1.msra.mxu0 %v573
    %634 = vmatprep.subr.mxu0 0.0
    %635 = vmatpush1.msra.mxu0 %v574
    %636 = vmatprep.subr.mxu0 0.0
    %637 = vmatpush1.msra.mxu0 %v575
    %638 = vmatprep.subr.mxu0 0.0
    %639 = vmatpush1.msra.mxu0 %v576
    %640 = vmatprep.subr.mxu0 0.0
    %641 = vmatpush1.msra.mxu0 %v577
    %642 = vmatprep.subr.mxu0 0.0
    %643 = vmatpush1.msra.mxu0 %v578
    %644 = vmatprep.subr.mxu0 0.0
    %645 = vmatpush1.msra.mxu0 %v579
    %646 = vmatprep.subr.mxu0 0.0
    %647 = vmatpush1.msra.mxu0 %v580
    %648 = vmatprep.subr.mxu0 0.0
    %649 = vmatpush1.msra.mxu0 %v581
    %650 = vmatprep.subr.mxu0 0.0
    %651 = vmatpush1.msra.mxu0 %v582
    %652 = vmatprep.subr.mxu0 0.0
    %653 = vmatpush1.msra.mxu0 %v583
    %654 = vmatprep.subr.mxu0 0.0
    %655 = vmatpush1.msra.mxu0 %v584
    %656 = vmatprep.mubr.f32.mxu0 %v552
    %657 = vmatmul.mubr.f32.gmra.mrb[0].mxu0 %v551
    %v658 = vpop.f32.mrb[0].mxu0
    %v659 = vadd.f32 %v590, %v658
    %v660 = vpop.f32.mrb[0].mxu0
    %661 = vdwg.mxu0
    %662 = vst [vmem:[#allocation10] sm:$0xff] %v659
    // Predicated region
    $region46: #{tpu_custom_call.1} parent=1 // pred_check
      _
    $region47: #{tpu_custom_call.1} parent=1 // pred_check_branch
      %664 = sbr.rel (0) target = $region49
    $region48: #{tpu_custom_call.1} parent=1 // pred_region
      %s666 = ssub.s32 128, 128
      %667 = vsyncadd [#allocation4], %s666
      %s669 = sshll.u32 [#allocation10], 4
      %s670 = int_to_ptr.vmem [resolvable:$true] %s669
      %672 = dma.vmem_to_hbm [thread:$0]  %s670, 128, %s7, [#allocation4]
    $region49: #{tpu_custom_call.1} parent=1 // pred_fallthru
      _
    // Predicated region
    $region50: #{tpu_custom_call.1} parent=1 // pred_check
      _
    $region51: #{tpu_custom_call.1} parent=1 // pred_check_branch
      %674 = sbr.rel (0) target = $region53
    $region52: #{tpu_custom_call.1} parent=1 // pred_region
      %675 = dma.done [#allocation4], 128
    $region53: #{tpu_custom_call.1} parent=1 // pred_fallthru
      _
    %676 = vsyncpa [#allocation3], 1
    %677 = vsyncpa [#allocation6], 1
    %678 = vsyncpa [#allocation9], 1
    %679 = vsyncpa [#allocation4], 1

</llo_original>
